<compile_context>
chip_gen: v6e
topology: v6e:2x2x1
jax: 0.10.0
libtpu: 0.0.40
codegen_flags: <defaults>
</compile_context>

<pallas_src>
import functools

import jax
import jax.numpy as jnp
from jax.experimental import pallas as pl
from jax.experimental.pallas import tpu as pltpu

IN_FEATURES = 20
HIDDEN = 10
OUT_FEATURES = 1


def _round_up(n, m):
    return ((n + m - 1) // m) * m


def mlp_kernel(x_ref, w1t_ref, b1_ref, w2_ref, b2_ref, o_ref):
    # x_ref:   (TILE_B, 20)   batch tile
    # w1t_ref: (20, 10)       first-layer weight, pre-transposed (resident)
    # b1_ref:  (1, 10)        first-layer bias (resident)
    # w2_ref:  (1, 10)        second-layer weight as a row (resident)
    # b2_ref:  (1, 1)         second-layer bias, SMEM scalar
    # o_ref:   (TILE_B, 1)
    h = jnp.dot(x_ref[...], w1t_ref[...], preferred_element_type=jnp.float32)
    h = jnp.tanh(h + b1_ref[...])                       # EUP transcendental
    # Layer 2 (hidden -> 1): VPU multiply + lane reduce (no 1-column MXU matmul).
    y = jnp.sum(h * w2_ref[...], axis=-1, keepdims=True) + b2_ref[0, 0]
    o_ref[...] = y.astype(o_ref.dtype)


@functools.partial(jax.jit, static_argnames=("tile_b",))
def _multi_linear_pallas(x, w1, b1, w2, b2, tile_b):
    B = x.shape[0]

    # Pick the batch tile: 512 rows when the batch is large (measured ~85% of
    # the HBM roofline for 512+ tiles), otherwise one 8-aligned tile.
    tb = tile_b if B >= tile_b else _round_up(B, 8)
    b_pad = _round_up(B, tb)
    if b_pad != B:
        x = jnp.pad(x, ((0, b_pad - B), (0, 0)))

    w1t = w1.T                        # (20, 10)  tiny, wrapper-side glue
    b1r = b1.reshape(1, HIDDEN)       # (1, 10)
    w2r = w2.reshape(1, HIDDEN)       # (1, 10)   row form, no transpose needed
    b2s = b2.reshape(1, 1)            # (1, 1)    SMEM scalar

    y = pl.pallas_call(
        mlp_kernel,
        out_shape=jax.ShapeDtypeStruct((b_pad, OUT_FEATURES), x.dtype),
        grid=(b_pad // tb,),
        in_specs=[
            pl.BlockSpec((tb, IN_FEATURES), lambda i: (i, 0)),
            # Parameters: constant block index across the grid -> copied into
            # VMEM once and kept resident for every batch tile.
            pl.BlockSpec((IN_FEATURES, HIDDEN), lambda i: (0, 0)),
            pl.BlockSpec((1, HIDDEN), lambda i: (0, 0)),
            pl.BlockSpec((1, HIDDEN), lambda i: (0, 0)),
            pl.BlockSpec(memory_space=pltpu.MemorySpace.SMEM),
        ],
        out_specs=pl.BlockSpec((tb, OUT_FEATURES), lambda i: (i, 0)),
        compiler_params=pltpu.CompilerParams(
            dimension_semantics=("parallel",),   # 2x TCs on v7x; no-op v5e/v6e
        ),
    )(x, w1t, b1r, w2r, b2s)

    return y[:B] if b_pad != B else y


def multi_linear_forward(x, w1, b1, w2, b2, *, tile_b=512):
    """Equivalent of Multi_Linear.forward for x of shape (B, 20)."""
    if isinstance(x, (list, tuple)):   # mirrors the `isinstance(x, list)` branch
        [x] = x
    return _multi_linear_pallas(x, w1, b1, w2, b2, tile_b)


def init_params(key):
    """PyTorch-default Linear init: U(-1/sqrt(fan_in), 1/sqrt(fan_in))."""
    k1w, k1b, k2w, k2b = jax.random.split(key, 4)
    bound1 = 1.0 / jnp.sqrt(jnp.float32(IN_FEATURES))
    bound2 = 1.0 / jnp.sqrt(jnp.float32(HIDDEN))
    w1 = jax.random.uniform(k1w, (HIDDEN, IN_FEATURES), jnp.float32, -bound1, bound1)
    b1 = jax.random.uniform(k1b, (HIDDEN,), jnp.float32, -bound1, bound1)
    w2 = jax.random.uniform(k2w, (OUT_FEATURES, HIDDEN), jnp.float32, -bound2, bound2)
    b2 = jax.random.uniform(k2b, (OUT_FEATURES,), jnp.float32, -bound2, bound2)
    return w1, b1, w2, b2


def reference_forward(x, w1, b1, w2, b2):
    return jnp.tanh(x @ w1.T + b1) @ w2.T + b2


if __name__ == "__main__":
    key = jax.random.PRNGKey(0)
    k_param, k_x1, k_x2 = jax.random.split(key, 3)
    w1, b1, w2, b2 = init_params(k_param)

    # Small batch consistent with the module: (batch=8, features=20).
    x_small = jax.random.normal(k_x1, (8, IN_FEATURES), jnp.float32)
    y_small = jax.block_until_ready(multi_linear_forward([x_small], w1, b1, w2, b2))
    assert y_small.shape == (8, OUT_FEATURES)
    assert jnp.allclose(y_small, reference_forward(x_small, w1, b1, w2, b2),
                        atol=1e-5, rtol=1e-4)

    # Larger, non-tile-aligned batch exercising the 512-row grid + padding path.
    x_big = jax.random.normal(k_x2, (1037, IN_FEATURES), jnp.float32)
    y_big = jax.block_until_ready(multi_linear_forward(x_big, w1, b1, w2, b2))
    assert y_big.shape == (1037, OUT_FEATURES)
    assert jnp.allclose(y_big, reference_forward(x_big, w1, b1, w2, b2),
                        atol=1e-5, rtol=1e-4)

    print("KERNEL_OK")
</pallas_src>

<mosaic_0001>
module attributes {stable_mosaic.version = 11 : i64} {
  func.func @mlp_kernel(%arg0: i32, %arg1: memref<8x20xf32, #tpu.memory_space<vmem>>, %arg2: memref<20x10xf32, #tpu.memory_space<vmem>>, %arg3: memref<1x10xf32, #tpu.memory_space<vmem>>, %arg4: memref<1x10xf32, #tpu.memory_space<vmem>>, %arg5: memref<1x1xf32, #tpu.memory_space<smem>>, %arg6: memref<8x1xf32, #tpu.memory_space<vmem>>) attributes {dimension_semantics = [#tpu.dimension_semantics<parallel>], iteration_bounds = array<i64: 1>, scalar_prefetch = 0 : i64, scratch_operands = 0 : i64, tpu.core_type = #tpu.core_type<tc>, window_params = [{transform_indices = @transform_0, window_bounds = array<i64: 8, 20>}, {pipeline_mode = #tpu.pipeline_mode<synchronous>, transform_indices = @transform_1, window_bounds = array<i64: 20, 10>}, {pipeline_mode = #tpu.pipeline_mode<synchronous>, transform_indices = @transform_2, window_bounds = array<i64: 1, 10>}, {pipeline_mode = #tpu.pipeline_mode<synchronous>, transform_indices = @transform_3, window_bounds = array<i64: 1, 10>}, {transform_indices = @transform_4, window_bounds = array<i64: 1, 1>}, {transform_indices = @transform_5, window_bounds = array<i64: 8, 1>}]} {
    %c0 = arith.constant 0 : index
    %c0_0 = arith.constant 0 : index
    %0 = vector.load %arg1[%c0, %c0_0] : memref<8x20xf32, #tpu.memory_space<vmem>>, vector<8x20xf32>
    %c0_1 = arith.constant 0 : index
    %c0_2 = arith.constant 0 : index
    %1 = vector.load %arg2[%c0_1, %c0_2] : memref<20x10xf32, #tpu.memory_space<vmem>>, vector<20x10xf32>
    %cst = arith.constant dense<0.000000e+00> : vector<8x10xf32>
    %2 = tpu.matmul %0, %1, %cst {dimension_numbers = #tpu.dot_dimension_numbers<[1], [0], [0], [1], [0, 0, 1, 1], [], []>} : vector<8x20xf32>, vector<20x10xf32>, vector<8x10xf32> -> vector<8x10xf32>
    %c0_3 = arith.constant 0 : index
    %c0_4 = arith.constant 0 : index
    %3 = vector.load %arg3[%c0_3, %c0_4] : memref<1x10xf32, #tpu.memory_space<vmem>>, vector<1x10xf32>
    %4 = vector.broadcast %3 : vector<1x10xf32> to vector<8x10xf32>
    %5 = arith.addf %2, %4 : vector<8x10xf32>
    %6 = math.tanh %5 : vector<8x10xf32>
    %c0_5 = arith.constant 0 : index
    %c0_6 = arith.constant 0 : index
    %7 = vector.load %arg4[%c0_5, %c0_6] : memref<1x10xf32, #tpu.memory_space<vmem>>, vector<1x10xf32>
    %8 = vector.broadcast %7 : vector<1x10xf32> to vector<8x10xf32>
    %9 = arith.mulf %6, %8 : vector<8x10xf32>
    %cst_7 = arith.constant dense<0.000000e+00> : vector<8xf32>
    %10 = vector.multi_reduction <add>, %9, %cst_7 [1] : vector<8x10xf32> to vector<8xf32>
    %11 = vector.shape_cast %10 : vector<8xf32> to vector<8x1xf32>
    %c0_8 = arith.constant 0 : index
    %c0_9 = arith.constant 0 : index
    %12 = memref.load %arg5[%c0_8, %c0_9] : memref<1x1xf32, #tpu.memory_space<smem>>
    %13 = vector.broadcast %12 : f32 to vector<8x1xf32>
    %14 = arith.addf %11, %13 : vector<8x1xf32>
    %c0_10 = arith.constant 0 : index
    %c0_11 = arith.constant 0 : index
    %15 = vector.load %arg6[%c0_10, %c0_11] : memref<8x1xf32, #tpu.memory_space<vmem>>, vector<8x1xf32>
    tpu.vector_store %arg6[%c0_10, %c0_11], %14 {strides = array<i32>} : memref<8x1xf32, #tpu.memory_space<vmem>>, vector<8x1xf32>,
    return
  }
  func.func @transform_0(%arg0: i32) -> (i32, i32) {
    %c0_i32 = arith.constant 0 : i32
    %c0_i32_0 = arith.constant 0 : i32
    return %arg0, %c0_i32 : i32, i32
  }
  func.func @transform_1(%arg0: i32) -> (i32, i32) {
    %c0_i32 = arith.constant 0 : i32
    %c0_i32_0 = arith.constant 0 : i32
    %c0_i32_1 = arith.constant 0 : i32
    return %c0_i32, %c0_i32_0 : i32, i32
  }
  func.func @transform_2(%arg0: i32) -> (i32, i32) {
    %c0_i32 = arith.constant 0 : i32
    %c0_i32_0 = arith.constant 0 : i32
    %c0_i32_1 = arith.constant 0 : i32
    return %c0_i32, %c0_i32_0 : i32, i32
  }
  func.func @transform_3(%arg0: i32) -> (i32, i32) {
    %c0_i32 = arith.constant 0 : i32
    %c0_i32_0 = arith.constant 0 : i32
    %c0_i32_1 = arith.constant 0 : i32
    return %c0_i32, %c0_i32_0 : i32, i32
  }
  func.func @transform_4(%arg0: i32) -> (i32, i32) {
    %c0_i32 = arith.constant 0 : i32
    %c0_i32_0 = arith.constant 0 : i32
    %c0_i32_1 = arith.constant 0 : i32
    return %c0_i32, %c0_i32_0 : i32, i32
  }
  func.func @transform_5(%arg0: i32) -> (i32, i32) {
    %c0_i32 = arith.constant 0 : i32
    %c0_i32_0 = arith.constant 0 : i32
    return %arg0, %c0_i32 : i32, i32
  }
}

</mosaic_0001>

<llo_original>
// kernel: _multi_linear_pallas.1
$region0: #{_multi_linear_pallas.1}
  #allocation0 [shape = 'u32[]', space=smem, size = 0x4, offset = 0x4, fixed_abs, tag = 'smem constant byte address 0x4 - core index']
  #allocation1 [shape = 'u32[144,128]{1,0:T(1,128)}', space=vmem, size = 0x12000, scoped, tag = 'internal scratch']
  #allocation2 [shape = 'f32[1,1]{1,0:T(1,128)S(6)}', space=smem, size = 0x200, scoped, tag = 'scoped memory for _multi_linear_pallas.1']
  %s0 = inlined_call_operand.vmem [shape: f32[8,20], index: 0, kind: input, shape index: {}]
  %s1 = inlined_call_operand.vmem [shape: f32[20,10], index: 1, kind: input, shape index: {}]
  %s2 = inlined_call_operand.vmem [shape: f32[1,10], index: 2, kind: input, shape index: {}]
  %s3 = inlined_call_operand.vmem [shape: f32[1,10], index: 3, kind: input, shape index: {}]
  %s4 = inlined_call_operand.<no memory space> [shape: f32[1,1], index: 4, kind: input, shape index: {}]
  %s5 = inlined_call_operand.vmem [shape: f32[8,1], index: 5, kind: output, shape index: {}]
  %s6 = sld [smem:[#allocation0]]
  $region30: #{_multi_linear_pallas.1} parent=0
    _
  %s8 = ssub.s32 1, %s6
  %s9 = scalar_select 0, %s8, %s6
  %10 = sst [smem:[#allocation2]] %s4
  // Predicated region
  $region2: #{_multi_linear_pallas.1} parent=0 // pred_check
    _
  $region3: #{_multi_linear_pallas.1} parent=0 // pred_check_branch
    %12 = sbr.rel (0) target = $region5
  $region4: #{_multi_linear_pallas.1} parent=0 // pred_region
    _
  $region5: #{_multi_linear_pallas.1} parent=0 // pred_fallthru
    _
  // Predicated region
  $region6: #{_multi_linear_pallas.1} parent=0 // pred_check
    _
  $region7: #{_multi_linear_pallas.1} parent=0 // pred_check_branch
    %14 = sbr.rel (0) target = $region9
  $region8: #{_multi_linear_pallas.1} parent=0 // pred_region
    _
  $region9: #{_multi_linear_pallas.1} parent=0 // pred_fallthru
    _
  // Predicated region
  $region10: #{_multi_linear_pallas.1} parent=0 // pred_check
    _
  $region11: #{_multi_linear_pallas.1} parent=0 // pred_check_branch
    %16 = sbr.rel (0) target = $region13
  $region12: #{_multi_linear_pallas.1} parent=0 // pred_region
    _
  $region13: #{_multi_linear_pallas.1} parent=0 // pred_fallthru
    _
  // Predicated region
  $region14: #{_multi_linear_pallas.1} parent=0 // pred_check
    _
  $region15: #{_multi_linear_pallas.1} parent=0 // pred_check_branch
    %18 = sbr.rel (0) target = $region17
  $region16: #{_multi_linear_pallas.1} parent=0 // pred_region
    _
  $region17: #{_multi_linear_pallas.1} parent=0 // pred_fallthru
    _
  // Predicated region
  $region18: #{_multi_linear_pallas.1} parent=0 // pred_check
    _
  $region19: #{_multi_linear_pallas.1} parent=0 // pred_check_branch
    %20 = sbr.rel (0) target = $region21
  $region20: #{_multi_linear_pallas.1} parent=0 // pred_region
    _
  $region21: #{_multi_linear_pallas.1} parent=0 // pred_fallthru
    _
  %v21 = vld [vmem:[%s0] sm:$0xff]
  %v22 = vld [vmem:[%s1] sm:$0xff]
  %v23 = vld [vmem:[%s1 + $0x8] sm:$0xff]
  %v24 = vld [vmem:[%s1 + $0x10] sm:$0xf]
  %v25 = vld [vmem:[%s2] sm:$0x1]
  %v27 = vlaneseq
  %v28 = vshrl.u32 %v27, 7
  %v29 = vsub.s32 0, %v28
  %v30 = vrot.slane %v25, %v29
  %vm32 = vcmask 162816
  %v34 = vsel %vm32, %v21, 0
  %vm36 = vcmask 1043456
  %v38 = vsel %vm36, %v24, 0
  %40 = vmatprep.subr.mxu0 0.0
  %41 = vmatpush1.msra.mxu0 0.0
  %42 = vmatprep.subr.mxu0 0.0
  %43 = vmatpush1.msra.mxu0 0.0
  %44 = vmatprep.subr.mxu0 0.0
  %45 = vmatpush1.msra.mxu0 0.0
  %46 = vmatprep.subr.mxu0 0.0
  %47 = vmatpush1.msra.mxu0 0.0
  %48 = vmatprep.subr.mxu0 0.0
  %49 = vmatpush1.msra.mxu0 0.0
  %50 = vmatprep.subr.mxu0 0.0
  %51 = vmatpush1.msra.mxu0 0.0
  %52 = vmatprep.subr.mxu0 0.0
  %53 = vmatpush1.msra.mxu0 0.0
  %54 = vmatprep.subr.mxu0 0.0
  %55 = vmatpush1.msra.mxu0 0.0
  %56 = vmatprep.subr.mxu0 0.0
  %57 = vmatpush1.msra.mxu0 0.0
  %58 = vmatprep.subr.mxu0 0.0
  %59 = vmatpush1.msra.mxu0 0.0
  %60 = vmatprep.subr.mxu0 0.0
  %61 = vmatpush1.msra.mxu0 0.0
  %62 = vmatprep.subr.mxu0 0.0
  %63 = vmatpush1.msra.mxu0 0.0
  %64 = vmatprep.subr.mxu0 0.0
  %65 = vmatpush1.msra.mxu0 0.0
  %66 = vmatprep.subr.mxu0 0.0
  %67 = vmatpush1.msra.mxu0 %v38
  %68 = vmatprep.subr.mxu0 0.0
  %69 = vmatpush1.msra.mxu0 %v23
  %70 = vmatprep.subr.mxu0 0.0
  %71 = vmatpush1.msra.mxu0 %v22
  %72 = vmatprep.subr.mxu0 0.0
  %73 = vmatpush2.msra.mxu0 0.0
  %74 = vmatprep.subr.mxu0 0.0
  %75 = vmatpush2.msra.mxu0 0.0
  %76 = vmatprep.subr.mxu0 0.0
  %77 = vmatpush2.msra.mxu0 0.0
  %78 = vmatprep.subr.mxu0 0.0
  %79 = vmatpush2.msra.mxu0 0.0
  %80 = vmatprep.subr.mxu0 0.0
  %81 = vmatpush2.msra.mxu0 0.0
  %82 = vmatprep.subr.mxu0 0.0
  %83 = vmatpush2.msra.mxu0 0.0
  %84 = vmatprep.subr.mxu0 0.0
  %85 = vmatpush2.msra.mxu0 0.0
  %86 = vmatprep.subr.mxu0 0.0
  %87 = vmatpush2.msra.mxu0 0.0
  %88 = vmatprep.subr.mxu0 0.0
  %89 = vmatpush2.msra.mxu0 0.0
  %90 = vmatprep.subr.mxu0 0.0
  %91 = vmatpush2.msra.mxu0 0.0
  %92 = vmatprep.subr.mxu0 0.0
  %93 = vmatpush2.msra.mxu0 0.0
  %94 = vmatprep.subr.mxu0 0.0
  %95 = vmatpush2.msra.mxu0 0.0
  %96 = vmatprep.subr.mxu0 0.0
  %97 = vmatpush2.msra.mxu0 0.0
  %98 = vmatprep.subr.mxu0 0.0
  %99 = vmatpush2.msra.mxu0 0.0
  %100 = vmatprep.subr.mxu0 0.0
  %101 = vmatpush2.msra.mxu0 0.0
  %102 = vmatprep.subr.mxu0 0.0
  %103 = vmatpush2.msra.mxu0 0.0
  %104 = vmatprep.mubr.f32.mxu0 0.0
  %105 = vmatmul.mubr.f32.gmra.mxu0 %v34
  %v106 = vpop.f32.mrf.mxu0
  %v107 = vadd.f32 %v30, %v106
  %v108 = vpop.f32.mrf.mxu0
  %109 = vdwg.mxu0
  %v110 = vtanh.pop %v107
  %v111 = vld [vmem:[%s3] sm:$0x1]
  %v113 = vlaneseq
  %v114 = vshrl.u32 %v113, 7
  %v115 = vsub.s32 0, %v114
  %v116 = vrot.slane %v111, %v115
  %v118 = vmul.f32 %v110, %v116
  %vm119 = vcmask 80896
  %v120 = vsel %vm119, %v118, 0.0
  %121 = vadd.xlane.f32.xlu0 %v120
  %v122 = vpop.xlane.xlu0 %121
  %s123 = sld [smem:[#allocation2]]
  %v124 = vstv %s123
  %v125 = vadd.f32 %v122, %v124
  %vm126 = vcmask 7168
  %127 = vst.msk [vmem:[%s5] sm:$0xff] %vm126, %v125
  // Predicated region
  $region22: #{_multi_linear_pallas.1} parent=0 // pred_check
    _
  $region23: #{_multi_linear_pallas.1} parent=0 // pred_check_branch
    %129 = sbr.rel (0) target = $region25
  $region24: #{_multi_linear_pallas.1} parent=0 // pred_region
    _
  $region25: #{_multi_linear_pallas.1} parent=0 // pred_fallthru
    _
  // Predicated region
  $region26: #{_multi_linear_pallas.1} parent=0 // pred_check
    _
  $region27: #{_multi_linear_pallas.1} parent=0 // pred_check_branch
    %131 = sbr.rel (0) target = $region29
  $region28: #{_multi_linear_pallas.1} parent=0 // pred_region
    _
  $region29: #{_multi_linear_pallas.1} parent=0 // pred_fallthru
    _

</llo_original>
